<compile_context>
chip_gen: v5e
topology: v5e:2x2
jax: 0.10.0
libtpu: 0.0.40
codegen_flags: <defaults>
</compile_context>

<pallas_src>
import jax
import jax.numpy as jnp
import numpy as np
from jax.experimental import pallas as pl
from jax.experimental.pallas import tpu as pltpu


def _deconv_bias_relu_kernel(w_ref, b_ref, x_ref, o_ref):
    # w_ref: (Cout*k^3, Cin)   matmul dtype (x.dtype unless compute_dtype given)
    # b_ref: (Cout*k^3, 1)     f32 per-row bias (zeros when the module has none)
    # x_ref: (Cin, T)          one spatial tile of one batch element, stored dtype
    # o_ref: (Cout*k^3, T)     lane-dense along T, final output dtype
    wb = w_ref[...]
    xb = x_ref[...]
    if xb.dtype != wb.dtype:
        # In-kernel cast: VPU has slack, and it avoids a separate XLA HBM pass.
        xb = xb.astype(wb.dtype)
    acc = jnp.dot(wb, xb, preferred_element_type=jnp.float32)
    acc = acc + b_ref[...]                      # (Ncols, 1) broadcast over lanes
    o_ref[...] = jnp.maximum(acc, 0.0).astype(o_ref.dtype)   # fused bias + ReLU


def _vmem_limit_bytes():
    """Generation-aware scoped-VMEM limit (safe on v5e/v6e/v7x)."""
    phys = 64 << 20                       # conservative fallback (v7x per-core VMEM)
    try:
        phys = int(pltpu.get_tpu_info().vmem_capacity_bytes)
    except Exception:
        pass
    # Keep clear of physical capacity: Mosaic internal scratch, semaphores, the
    # resident weight/bias copies, etc. -> 48 MiB on v7x, 96 MiB on v5e/v6e.
    return min((phys * 3) // 4, 96 << 20)


def deconv_block_forward(x, w, *, kernel_size, stride, padding=0,
                         output_padding=0, bias=None, batchnorm=False,
                         residual=False, spatial_tile=65536,
                         compute_dtype=None, buffer_count=2):
    """Forward of deconvBlock (ConvTranspose3d [+bias] + ReLU), Pallas hot path."""
    assert stride == kernel_size and padding == 0 and output_padding == 0, (
        "only the stride==kernel_size, padding==0 (VoxelMorph upsampling) "
        "configuration is implemented")
    # TODO(synk): general stride/padding needs an overlapping col2im scatter-add.
    assert not batchnorm   # TODO(synk): BatchNorm3d (batch statistics) not fused.
    assert not residual    # stride-k upsampling: input/output shapes cannot match.

    N, Cin, D, H, W = x.shape
    k = kernel_size
    assert w.shape[0] == Cin and w.shape[2:] == (k, k, k)
    Cout = w.shape[1]
    Ncols = Cout * k * k * k
    DHW = D * H * W

    out_dtype = x.dtype
    mm_dtype = jnp.dtype(compute_dtype) if compute_dtype is not None else jnp.dtype(x.dtype)

    # NCDHW -> (N, Cin, DHW): a free view, no transpose / no cast of activations.
    x_flat = x.reshape(N, Cin, DHW)
    # ConvTranspose3d weight (Cin, Cout, kD, kH, kW) -> (Cout*k^3, Cin). Tiny.
    w_t = jnp.transpose(w.reshape(Cin, Ncols)).astype(mm_dtype)
    # Per-row bias: row order is (cout, kd, kh, kw) -> repeat each channel k^3 times.
    if bias is None:
        b_col = jnp.zeros((Ncols, 1), jnp.float32)
    else:
        assert bias.shape == (Cout,)
        b_col = jnp.repeat(bias.astype(jnp.float32), k * k * k).reshape(Ncols, 1)

    # --- spatial tile: big, lane-dense, accumulator-aware, VMEM-safe per gen ---
    x_isize = jnp.dtype(x.dtype).itemsize
    o_isize = jnp.dtype(out_dtype).itemsize
    vmem_limit = _vmem_limit_bytes()
    budget = vmem_limit - (8 << 20)              # headroom: weight/bias, Mosaic scratch
    per_elem = (buffer_count * Cin * x_isize     # pipelined input block(s)
                + buffer_count * Ncols * o_isize # pipelined output block(s)
                + Ncols * 4)                     # f32 accumulator / ReLU temp
    T = min(DHW, int(spatial_tile))
    T = min(T, max(128, budget // per_elem))
    if T < DHW:
        T = max(128, (T // 128) * 128)           # lane-dense: unmasked vst, dense DMA
    if N == 1 and T >= DHW and DHW >= 256:
        # Megacore: guarantee >= 2 independent grid blocks on 2-core chips (v7x).
        T = max(128, ((pl.cdiv(DHW, 2) + 127) // 128) * 128)
    grid = (N, pl.cdiv(DHW, T))
    # Trailing partial tiles: the output store is masked by Pallas; the padded
    # input columns may hold garbage, which is safe because the matmul+ReLU is
    # column-independent (would need explicit masking if BN were ever fused).

    def _buffered(shape, index_map):
        if buffer_count == 2:                    # default double-buffering
            return pl.BlockSpec(shape, index_map)
        return pl.BlockSpec(shape, index_map, pipeline_mode=pl.Buffered(buffer_count))

    cost = pl.CostEstimate(
        flops=int(2 * N * DHW * Ncols * Cin),
        transcendentals=0,
        bytes_accessed=int(N * Cin * DHW * x_isize        # activations in (stored dtype)
                           + N * Ncols * DHW * o_isize    # activations out (final dtype)
                           + Ncols * Cin * jnp.dtype(mm_dtype).itemsize
                           + Ncols * 4))

    out_flat = pl.pallas_call(
        _deconv_bias_relu_kernel,
        out_shape=jax.ShapeDtypeStruct((N, Ncols, DHW), out_dtype),
        grid=grid,
        in_specs=[
            pl.BlockSpec((Ncols, Cin), lambda n, j: (0, 0)),     # weight (resident)
            pl.BlockSpec((Ncols, 1), lambda n, j: (0, 0)),       # bias   (resident)
            _buffered((None, Cin, T), lambda n, j: (n, 0, j)),   # x tile
        ],
        out_specs=_buffered((None, Ncols, T), lambda n, j: (n, 0, j)),
        compiler_params=pltpu.CompilerParams(
            dimension_semantics=("parallel", "parallel"),
            vmem_limit_bytes=int(vmem_limit)),
        cost_estimate=cost,
    )(w_t, b_col, x_flat)

    # Depth-to-space back to NCDHW:
    #   (N, Cout, kd, kh, kw, D, H, W) -> (N, Cout, D, kd, H, kh, W, kw).
    # TODO(synk): fuse this pixel shuffle into the kernel's store path. The
    # kd/kh legs could ride the output BlockSpec index_map, but the (w, kw)
    # lane interleave cannot come out of a single matmul and needs either
    # relayout-heavy minor-dim reshapes or lane-strided stores, neither of
    # which lowers reliably in Mosaic today; input-expansion alternatives
    # re-pay the saved HBM traffic. Kept as one XLA transpose for now.
    out = out_flat.reshape(N, Cout, k, k, k, D, H, W)
    out = jnp.transpose(out, (0, 1, 5, 2, 6, 3, 7, 4))
    return out.reshape(N, Cout, D * k, H * k, W * k)


def _reference(x, w, kernel_size, stride, bias=None):
    """Independent reference: ConvTranspose3d via lhs-dilated conv, then ReLU."""
    k = kernel_size
    ker = jnp.flip(w, axis=(2, 3, 4)).transpose(1, 0, 2, 3, 4)  # (Cout, Cin, k,k,k)
    y = jax.lax.conv_general_dilated(
        x, ker,
        window_strides=(1, 1, 1),
        padding=[(k - 1, k - 1)] * 3,
        lhs_dilation=(stride, stride, stride),
        dimension_numbers=("NCDHW", "OIDHW", "NCDHW"),
        precision=jax.lax.Precision.HIGHEST)
    if bias is not None:
        y = y + bias.reshape(1, -1, 1, 1, 1)
    return jnp.maximum(y, 0.0)


if __name__ == "__main__":
    key = jax.random.PRNGKey(0)

    # Small shapes consistent with a VoxelMorph decoder stage.
    configs = [
        #  N  Cin Cout  D  H  W  k  bias
        (2,  8,   4,  4, 4, 4, 2, False),   # grid (2, 1): batch-parallel
        (1,  8,   8,  8, 8, 8, 2, True),    # grid (1, 2): forced spatial split
    ]
    for (N, Cin, Cout, D, H, W, k, with_bias) in configs:
        kx, kw_, kb, key = jax.random.split(key, 4)
        x = jax.random.normal(kx, (N, Cin, D, H, W), dtype=jnp.float32)
        # ConvTranspose3d weight layout: (Cin, Cout, kD, kH, kW).
        w = jax.random.normal(kw_, (Cin, Cout, k, k, k), dtype=jnp.float32)
        w = w * (1.0 / np.sqrt(Cin * k * k * k))
        b = jax.random.normal(kb, (Cout,), dtype=jnp.float32) if with_bias else None

        out = deconv_block_forward(x, w, kernel_size=k, stride=k, bias=b)
        out = jax.block_until_ready(out)

        assert out.shape == (N, Cout, D * k, H * k, W * k), out.shape
        assert out.dtype == x.dtype, out.dtype
        ref = _reference(x, w, k, k, bias=b)
        # f32 in/out with f32 accumulation; tolerance covers the MXU's internal
        # multi-pass handling of f32 matmuls.
        np.testing.assert_allclose(np.asarray(out), np.asarray(ref),
                                   rtol=1e-2, atol=1e-2)
    print("KERNEL_OK")
</pallas_src>

<mosaic_0001>
module attributes {stable_mosaic.version = 11 : i64} {
  func.func @_deconv_bias_relu_kernel(%arg0: i32, %arg1: i32, %arg2: memref<32x8xf32, #tpu.memory_space<vmem>>, %arg3: memref<32x1xf32, #tpu.memory_space<vmem>>, %arg4: memref<1x8x64xf32, #tpu.memory_space<vmem>>, %arg5: memref<1x32x64xf32, #tpu.memory_space<vmem>>) attributes {dimension_semantics = [#tpu.dimension_semantics<parallel>, #tpu.dimension_semantics<parallel>], iteration_bounds = array<i64: 2, 1>, scalar_prefetch = 0 : i64, scratch_operands = 0 : i64, tpu.core_type = #tpu.core_type<tc>, window_params = [{pipeline_mode = #tpu.pipeline_mode<synchronous>, transform_indices = @transform_0, window_bounds = array<i64: 32, 8>}, {pipeline_mode = #tpu.pipeline_mode<synchronous>, transform_indices = @transform_1, window_bounds = array<i64: 32, 1>}, {transform_indices = @transform_2, window_bounds = array<i64: 1, 8, 64>}, {transform_indices = @transform_3, window_bounds = array<i64: 1, 32, 64>}]} {
    %c0 = arith.constant 0 : index
    %c0_0 = arith.constant 0 : index
    %0 = vector.load %arg2[%c0, %c0_0] : memref<32x8xf32, #tpu.memory_space<vmem>>, vector<32x8xf32>
    %c0_1 = arith.constant 0 : index
    %c0_2 = arith.constant 0 : index
    %c0_3 = arith.constant 0 : index
    %1 = vector.load %arg4[%c0_1, %c0_2, %c0_3] : memref<1x8x64xf32, #tpu.memory_space<vmem>>, vector<1x8x64xf32>
    %2 = vector.shape_cast %1 : vector<1x8x64xf32> to vector<8x64xf32>
    %cst = arith.constant dense<0.000000e+00> : vector<32x64xf32>
    %3 = tpu.matmul %0, %2, %cst {dimension_numbers = #tpu.dot_dimension_numbers<[1], [0], [0], [1], [0, 0, 1, 1], [], []>} : vector<32x8xf32>, vector<8x64xf32>, vector<32x64xf32> -> vector<32x64xf32>
    %c0_4 = arith.constant 0 : index
    %c0_5 = arith.constant 0 : index
    %4 = vector.load %arg3[%c0_4, %c0_5] : memref<32x1xf32, #tpu.memory_space<vmem>>, vector<32x1xf32>
    %5 = vector.broadcast %4 : vector<32x1xf32> to vector<32x64xf32>
    %6 = arith.addf %3, %5 : vector<32x64xf32>
    %cst_6 = arith.constant 0.000000e+00 : f32
    %7 = vector.broadcast %cst_6 : f32 to vector<32x64xf32>
    %8 = arith.maximumf %6, %7 : vector<32x64xf32>
    %c0_7 = arith.constant 0 : index
    %c0_8 = arith.constant 0 : index
    %c0_9 = arith.constant 0 : index
    %9 = vector.load %arg5[%c0_7, %c0_8, %c0_9] : memref<1x32x64xf32, #tpu.memory_space<vmem>>, vector<1x32x64xf32>
    %10 = vector.shape_cast %9 : vector<1x32x64xf32> to vector<32x64xf32>
    %11 = vector.shape_cast %8 : vector<32x64xf32> to vector<1x32x64xf32>
    tpu.vector_store %arg5[%c0_7, %c0_8, %c0_9], %11 {strides = array<i32>} : memref<1x32x64xf32, #tpu.memory_space<vmem>>, vector<1x32x64xf32>,
    return
  }
  func.func @transform_0(%arg0: i32, %arg1: i32) -> (i32, i32) {
    %c0_i32 = arith.constant 0 : i32
    %c0_i32_0 = arith.constant 0 : i32
    %c0_i32_1 = arith.constant 0 : i32
    return %c0_i32, %c0_i32_0 : i32, i32
  }
  func.func @transform_1(%arg0: i32, %arg1: i32) -> (i32, i32) {
    %c0_i32 = arith.constant 0 : i32
    %c0_i32_0 = arith.constant 0 : i32
    %c0_i32_1 = arith.constant 0 : i32
    return %c0_i32, %c0_i32_0 : i32, i32
  }
  func.func @transform_2(%arg0: i32, %arg1: i32) -> (i32, i32, i32) {
    %c0_i32 = arith.constant 0 : i32
    %c0_i32_0 = arith.constant 0 : i32
    return %arg0, %c0_i32, %arg1 : i32, i32, i32
  }
  func.func @transform_3(%arg0: i32, %arg1: i32) -> (i32, i32, i32) {
    %c0_i32 = arith.constant 0 : i32
    %c0_i32_0 = arith.constant 0 : i32
    return %arg0, %c0_i32, %arg1 : i32, i32, i32
  }
}

</mosaic_0001>

<llo_original>
// kernel: tpu_custom_call.1
$region0: #{tpu_custom_call.1}
  #allocation0 [shape = 'u32[]', space=smem, size = 0x4, offset = 0x4, fixed_abs, tag = 'smem constant byte address 0x4 - core index']
  #allocation1 [shape = 'u32[72,128]{1,0:T(1,128)}', space=vmem, size = 0x9000, scoped, tag = 'internal scratch']
  %s0 = inlined_call_operand.vmem [shape: f32[32,8], index: 0, kind: input, shape index: {}]
  %s1 = inlined_call_operand.vmem [shape: f32[32,1], index: 1, kind: input, shape index: {}]
  %s2 = inlined_call_operand.vmem [shape: f32[2,8,64], index: 2, kind: input, shape index: {}]
  %s3 = inlined_call_operand.hbm [shape: f32[2,32,64], index: 3, kind: output, shape index: {}]
  %s4 = sld [smem:[#allocation0]]
  $region45: #{tpu_custom_call.1} parent=0
    _
  %s6 = ssub.s32 1, %s4
  %s7 = scalar_select 0, %s6, %s4
  $region1: #{tpu_custom_call.1} parent=0
    #allocation2 [shape = 'u8[32768]{0}', space=vmem, size = 0x8000, scoped, tag = 'output window, operand 0']
    #allocation3 [shape = 's32[2]{0}', space=sflag, size = 0x8, scoped, tag = 'scoped memory for tpu_custom_call.1']
    %8 = vsyncpa [#allocation3], 0
    %s9 = scalar_lea.sflag [#allocation3], 1
    %10 = vsyncpa %s9, 0
    loop: start=0, step=1, limit=4
    $region2: #{tpu_custom_call.1} parent=1 // loop_pre_header
      _
    $region3: #{tpu_custom_call.1} parent=1 // loop_header
      %s12 = sphi 0, %s16
      %p13 = scmp.ge.s32.totalorder %s12, 4
      %s19 = sphi 0, %s31
      %s20 = sphi 0, %s27
      %s21 = sphi 0, %s19
      %s22 = sphi 0, %s20
      %s23 = sphi 0, %s21
      %s24 = sphi 0, %s22
      %s32 = sphi 0, %s32
      %s34 = sphi 0, %s32
      %s35 = sphi 0, %s34
      %s49 = sphi 0, %s35
      %s53 = sphi 0, %s53
      %s55 = sphi 0, %s53
      %s56 = sphi 0, %s55
      %s70 = sphi 0, %s56
      %s78 = sphi 0, %s80
      %s81 = sphi 0, %s78
      %s82 = sphi 0, %s81
      %s98 = sphi 0, %s82
      %s106 = sphi 0, %s108
      %s109 = sphi 0, %s106
      %s110 = sphi 0, %s109
      %s126 = sphi 0, %s110
    $region4: #{tpu_custom_call.1} parent=1 // loop_header_branch
      %15 = sbr.rel (%p13) target = $region8
    $region5: #{tpu_custom_call.1} parent=1 // loop_body
      %s17 = ssub.s32 %s12, 1
      %s18 = ssub.s32 %s12, 2
      %s25 = sadd.s32 1, %s20
      %p26 = scmp.ge.s32.totalorder %s25, 1
      %s27 = scalar_select %p26, 0, %s25
      %s28 = sadd.s32 1, %s19
      %s29 = scalar_select %p26, %s28, %s19
      %p30 = scmp.ge.s32.totalorder %s29, 2
      %s31 = scalar_select %p30, 0, %s29
      %s33 = sadd.s32 %s32, 1
      %p36 = scmp.eq.s32.totalorder %s12, 1
      %p37 = scmp.ne.s32.totalorder %s32, %s34
      %p38 = scmp.eq.s32.totalorder %s12, 0
      %p39 = por %p37, %p38
      %p40 = scmp.ne.s32.totalorder %s32, %s34
      %p41 = scmp.eq.s32.totalorder %s17, 1
      %p42 = por %p40, %p41
      %p43 = scmp.ne.s32.totalorder %s34, %s35
      %p44 = scmp.eq.s32.totalorder %s17, 0
      %p45 = por %p43, %p44
      %p46 = scmp.ne.s32.totalorder %s34, %s35
      %p47 = scmp.eq.s32.totalorder %s18, 1
      %p48 = por %p46, %p47
      %p50 = scmp.ne.s32.totalorder %s35, %s49
      %p51 = scmp.eq.s32.totalorder %s18, 0
      %p52 = por %p50, %p51
      %s54 = sadd.s32 %s53, 1
      %p57 = scmp.eq.s32.totalorder %s12, 1
      %p58 = scmp.ne.s32.totalorder %s53, %s55
      %p59 = scmp.eq.s32.totalorder %s12, 0
      %p60 = por %p58, %p59
      %p61 = scmp.ne.s32.totalorder %s53, %s55
      %p62 = scmp.eq.s32.totalorder %s17, 1
      %p63 = por %p61, %p62
      %p64 = scmp.ne.s32.totalorder %s55, %s56
      %p65 = scmp.eq.s32.totalorder %s17, 0
      %p66 = por %p64, %p65
      %p67 = scmp.ne.s32.totalorder %s55, %s56
      %p68 = scmp.eq.s32.totalorder %s18, 1
      %p69 = por %p67, %p68
      %p71 = scmp.ne.s32.totalorder %s56, %s70
      %p72 = scmp.eq.s32.totalorder %s18, 0
      %p73 = por %p71, %p72
      %s74 = ssub.s32 %s19, %s31
      %s75 = ssub.s32 %s20, %s27
      %s76 = sor.u32 %s74, %s75
      %p77 = scmp.eq.s32.totalorder %s76, 0
      %s79 = sadd.s32 %s78, 1
      %s80 = scalar_select %p77, %s78, %s79
      %p83 = pneg %p77
      %p84 = scmp.eq.s32.totalorder %s12, 1
      %p85 = por %p83, %p84
      %p86 = scmp.ne.s32.totalorder %s78, %s81
      %p87 = scmp.eq.s32.totalorder %s12, 0
      %p88 = por %p86, %p87
      %p89 = scmp.ne.s32.totalorder %s78, %s81
      %p90 = scmp.eq.s32.totalorder %s17, 1
      %p91 = por %p89, %p90
      %p92 = scmp.ne.s32.totalorder %s81, %s82
      %p93 = scmp.eq.s32.totalorder %s17, 0
      %p94 = por %p92, %p93
      %p95 = scmp.ne.s32.totalorder %s81, %s82
      %p96 = scmp.eq.s32.totalorder %s18, 1
      %p97 = por %p95, %p96
      %p99 = scmp.ne.s32.totalorder %s82, %s98
      %p100 = scmp.eq.s32.totalorder %s18, 0
      %p101 = por %p99, %p100
      %s102 = ssub.s32 %s19, %s31
      %s103 = ssub.s32 %s20, %s27
      %s104 = sor.u32 %s102, %s103
      %p105 = scmp.eq.s32.totalorder %s104, 0
      %s107 = sadd.s32 %s106, 1
      %s108 = scalar_select %p105, %s106, %s107
      %p111 = pneg %p105
      %p112 = scmp.eq.s32.totalorder %s12, 1
      %p113 = por %p111, %p112
      %p114 = scmp.ne.s32.totalorder %s106, %s109
      %p115 = scmp.eq.s32.totalorder %s12, 0
      %p116 = por %p114, %p115
      %p117 = scmp.ne.s32.totalorder %s106, %s109
      %p118 = scmp.eq.s32.totalorder %s17, 1
      %p119 = por %p117, %p118
      %p120 = scmp.ne.s32.totalorder %s109, %s110
      %p121 = scmp.eq.s32.totalorder %s17, 0
      %p122 = por %p120, %p121
      %p123 = scmp.ne.s32.totalorder %s109, %s110
      %p124 = scmp.eq.s32.totalorder %s18, 1
      %p125 = por %p123, %p124
      %p127 = scmp.ne.s32.totalorder %s110, %s126
      %p128 = scmp.eq.s32.totalorder %s18, 0
      %p129 = por %p127, %p128
      %p130 = scmp.le.s32.totalorder 1, %s12
      %p131 = scmp.lt.s32.totalorder %s12, 3
      %p132 = pnand %p130, %p131
      %p133 = pneg %p132
      // Predicated region
      $region9: #{tpu_custom_call.1} parent=5 // pred_check
        _
      $region10: #{tpu_custom_call.1} parent=5 // pred_check_branch
        %135 = sbr.rel (%p132) target = $region12
      $region11: #{tpu_custom_call.1} parent=5 // pred_region
        %s136 = ssub.s32 %s12, 1
        // Predicated region
        $region13: #{tpu_custom_call.1} parent=11 // pred_check
          %p137 = pneg %p45
        $region14: #{tpu_custom_call.1} parent=11 // pred_check_branch
          %139 = sbr.rel (%p137) target = $region16
        $region15: #{tpu_custom_call.1} parent=11 // pred_region
          _
        $region16: #{tpu_custom_call.1} parent=11 // pred_fallthru
          _
        // Predicated region
        $region17: #{tpu_custom_call.1} parent=11 // pred_check
          %p140 = pneg %p66
        $region18: #{tpu_custom_call.1} parent=11 // pred_check_branch
          %142 = sbr.rel (%p140) target = $region20
        $region19: #{tpu_custom_call.1} parent=11 // pred_region
          _
        $region20: #{tpu_custom_call.1} parent=11 // pred_fallthru
          _
      $region12: #{tpu_custom_call.1} parent=5 // pred_fallthru
        _
      %p143 = scmp.lt.s32.totalorder %s12, 2
      // Predicated region
      $region21: #{tpu_custom_call.1} parent=5 // pred_check
        %p144 = pneg %p143
      $region22: #{tpu_custom_call.1} parent=5 // pred_check_branch
        %146 = sbr.rel (%p144) target = $region24
      $region23: #{tpu_custom_call.1} parent=5 // pred_region
        // Predicated region
        $region25: #{tpu_custom_call.1} parent=23 // pred_check
          %p147 = pneg %p88
        $region26: #{tpu_custom_call.1} parent=23 // pred_check_branch
          %149 = sbr.rel (%p147) target = $region28
        $region27: #{tpu_custom_call.1} parent=23 // pred_region
          %p150 = scmp.lt.s32.totalorder %s19, 1
          %s151 = scalar_select %p150, %s19, 1
          %p152 = scmp.lt.s32.totalorder %s20, 0
          %s153 = scalar_select %p152, %s20, 0
          %s154 = sadd.s32 %s153, %s151
          %s155 = smul.addr %s154, 8
          %s156 = scalar_lea.vmem %s2, %s155
        $region28: #{tpu_custom_call.1} parent=23 // pred_fallthru
          _
      $region24: #{tpu_custom_call.1} parent=5 // pred_fallthru
        _
      %p157 = scmp.le.s32.totalorder 1, %s12
      %p158 = scmp.lt.s32.totalorder %s12, 3
      %p159 = pnand %p157, %p158
      %p160 = pneg %p159
      // Predicated region
      $region29: #{tpu_custom_call.1} parent=5 // pred_check
        _
      $region30: #{tpu_custom_call.1} parent=5 // pred_check_branch
        %162 = sbr.rel (%p159) target = $region32
      $region31: #{tpu_custom_call.1} parent=5 // pred_region
        %s163 = ssub.s32 %s12, 1
        %p164 = pneg %p45
        %p165 = pneg %p42
        %p166 = pneg %p66
        %p167 = pneg %p63
        %p168 = scmp.lt.s32.totalorder %s21, 1
        %s169 = scalar_select %p168, %s21, 1
        %p170 = scmp.lt.s32.totalorder %s22, 0
        %s171 = scalar_select %p170, %s22, 0
        %s172 = sadd.s32 %s171, %s169
        %s173 = smul.addr %s172, 8
        %s174 = scalar_lea.vmem %s2, %s173
        %p175 = pneg %p94
        %p176 = pneg %p91
        %p177 = pneg %p122
        %p178 = pneg %p119
        %s179 = sand.u32 %s109, 1
        %s180 = scalar_lea.sflag [#allocation3], %s179
        %s181 = sand.u32 %s109, 1
        %s182 = smul.addr %s181, 32
        %s183 = scalar_lea.vmem [#allocation2], %s182
        %p184 = scmp.lt.s32.totalorder %s21, 1
        %s185 = scalar_select %p184, %s21, 1
        %p186 = scmp.lt.s32.totalorder %s22, 0
        %s187 = scalar_select %p186, %s22, 0
        %s188 = sadd.s32 %s187, %s185
        %s189 = smul.addr %s188, 8
        %s190 = scalar_lea.vmem %s2, %s189
        %v191 = vld [vmem:[%s0] sm:$0xff]
        %v192 = vld [vmem:[%s0 + $0x8] sm:$0xff]
        %v193 = vld [vmem:[%s0 + $0x10] sm:$0xff]
        %v194 = vld [vmem:[%s0 + $0x18] sm:$0xff]
        %v195 = vld [vmem:[%s190] sm:$0xff]
        %v196 = vld [vmem:[%s1] sm:$0xff]
        %v197 = vld [vmem:[%s1 + $0x8] sm:$0xff]
        %v198 = vld [vmem:[%s1 + $0x10] sm:$0xff]
        %v199 = vld [vmem:[%s1 + $0x18] sm:$0xff]
        %201 = vset.pattern.permute.xlu0 0
        %202 = vperm.xlu0 %201, %v196
        %v203 = vpop.permute.xlu0 %202
        %206 = vset.pattern.permute.xlu0 0
        %207 = vperm.xlu0 %206, %v197
        %v208 = vpop.permute.xlu0 %207
        %211 = vset.pattern.permute.xlu0 0
        %212 = vperm.xlu0 %211, %v198
        %v213 = vpop.permute.xlu0 %212
        %216 = vset.pattern.permute.xlu0 0
        %217 = vperm.xlu0 %216, %v199
        %v218 = vpop.permute.xlu0 %217
        %vm220 = vcmask 64512
        %v222 = vsel %vm220, %v191, 0
        %v225 = vsel %vm220, %v192, 0
        %v228 = vsel %vm220, %v193, 0
        %v231 = vsel %vm220, %v194, 0
        %233 = vmatpush.msra.mxu0 0.0
        %234 = vmatpush.msra.mxu0 0.0
        %235 = vmatpush.msra.mxu0 0.0
        %236 = vmatpush.msra.mxu0 0.0
        %237 = vmatpush.msra.mxu0 0.0
        %238 = vmatpush.msra.mxu0 0.0
        %239 = vmatpush.msra.mxu0 0.0
        %240 = vmatpush.msra.mxu0 0.0
        %241 = vmatpush.msra.mxu0 0.0
        %242 = vmatpush.msra.mxu0 0.0
        %243 = vmatpush.msra.mxu0 0.0
        %244 = vmatpush.msra.mxu0 0.0
        %245 = vmatpush.msra.mxu0 0.0
        %246 = vmatpush.msra.mxu0 0.0
        %247 = vmatpush.msra.mxu0 0.0
        %248 = vmatpush.msra.mxu0 %v195
        %249 = vmatmul.f32.gmra.mxu0 %v222
        %v250 = vpop.f32.mrf.mxu0
        %v251 = vadd.f32 %v203, %v250
        %252 = vmatmul.f32.gmra.mxu0 %v225
        %v253 = vpop.f32.mrf.mxu0
        %v254 = vadd.f32 %v208, %v253
        %255 = vmatmul.f32.gmra.mxu0 %v228
        %v256 = vpop.f32.mrf.mxu0
        %v257 = vadd.f32 %v213, %v256
        %258 = vmatmul.f32.gmra.mxu0 %v231
        %v259 = vpop.f32.mrf.mxu0
        %v260 = vadd.f32 %v218, %v259
        %261 = vdwg.mxu0
        %v262 = vmax.f32 %v251, 0.0
        %v263 = vmax.f32 %v254, 0.0
        %v264 = vmax.f32 %v257, 0.0
        %v265 = vmax.f32 %v260, 0.0
        %vm266 = vcmask 523264
        %267 = vst.msk [vmem:[%s183] sm:$0xff] %vm266, %v262
        %268 = vst.msk [vmem:[%s183 + $0x8] sm:$0xff] %vm266, %v263
        %269 = vst.msk [vmem:[%s183 + $0x10] sm:$0xff] %vm266, %v264
        %270 = vst.msk [vmem:[%s183 + $0x18] sm:$0xff] %vm266, %v265
        %s271 = sand.u32 %s109, 1
        %s272 = scalar_lea.sflag [#allocation3], %s271
        %s273 = sand.u32 %s109, 1
        %s274 = smul.addr %s273, 32
        %s275 = scalar_lea.vmem [#allocation2], %s274
        // Predicated region
        $region33: #{tpu_custom_call.1} parent=31 // pred_check
          %p276 = pneg %p119
        $region34: #{tpu_custom_call.1} parent=31 // pred_check_branch
          %278 = sbr.rel (%p276) target = $region36
        $region35: #{tpu_custom_call.1} parent=31 // pred_region
          %280 = vsyncadd %s272, 0
          %s281 = smul.addr %s21, 4
          %s282 = sadd.s32 %s22, %s281
          %s283 = smul.addr %s282, 8
          %s284 = scalar_lea.hbm %s3, %s283
          %s285 = sshll.u32 %s275, 4
          %s286 = int_to_ptr.vmem [resolvable:$true] %s285
          %s287 = sshll.u32 %s284, 4
          %s288 = int_to_ptr.hbm [resolvable:$true] %s287
          %293 = dma.vmem_to_hbm [thread:$0]  %s286, 512, %s288, %s272, 128, 128, 8
        $region36: #{tpu_custom_call.1} parent=31 // pred_fallthru
          _
      $region32: #{tpu_custom_call.1} parent=5 // pred_fallthru
        _
      %p294 = scmp.le.s32.totalorder 2, %s12
      // Predicated region
      $region37: #{tpu_custom_call.1} parent=5 // pred_check
        %p295 = pneg %p294
      $region38: #{tpu_custom_call.1} parent=5 // pred_check_branch
        %297 = sbr.rel (%p295) target = $region40
      $region39: #{tpu_custom_call.1} parent=5 // pred_region
        %s298 = ssub.s32 %s12, 2
        // Predicated region
        $region41: #{tpu_custom_call.1} parent=39 // pred_check
          %p299 = pneg %p125
        $region42: #{tpu_custom_call.1} parent=39 // pred_check_branch
          %301 = sbr.rel (%p299) target = $region44
        $region43: #{tpu_custom_call.1} parent=39 // pred_region
          %s302 = sand.u32 %s110, 1
          %s303 = scalar_lea.sflag [#allocation3], %s302
          %s304 = sand.u32 %s110, 1
          %s305 = smul.addr %s304, 32
          %s306 = scalar_lea.vmem [#allocation2], %s305
          %308 = dma.done %s303, 512
        $region44: #{tpu_custom_call.1} parent=39 // pred_fallthru
          _
      $region40: #{tpu_custom_call.1} parent=5 // pred_fallthru
        _
    $region6: #{tpu_custom_call.1} parent=1 // loop_footer
      %s16 = sadd.s32 1, %s12
    $region7: #{tpu_custom_call.1} parent=1 // loop_footer_branch
      %11 = sbr.rel target = $region3
    $region8: #{tpu_custom_call.1} parent=1 // loop_exit
      _
    %309 = vsyncpa [#allocation3], 1
    %s310 = scalar_lea.sflag [#allocation3], 1
    %311 = vsyncpa %s310, 1

</llo_original>
